<compile_context>
chip_gen: v7x
topology: tpu7x:2x2x1
jax: 0.10.0
libtpu: 0.0.40
codegen_flags: <defaults>
</compile_context>

<pallas_src>
import jax
import jax.numpy as jnp
from jax.experimental import pallas as pl
from jax.experimental.pallas import tpu as pltpu

IN_DIM = 192      # audio feature dim
HID_DIM = 128     # fc1 width
OUT_DIM = 34      # logits
OUT_PAD = 128     # lane-dense padded output width
DEFAULT_TILE_B = 512   # rows per grid step (multiple of 8; fits VMEM on v5e/v6e/v7x)


def _round_up(n, m):
    return ((n + m - 1) // m) * m


def _audio_net_kernel(x_ref, w1_ref, b1_ref, w2p_ref, b2p_ref, o_ref):
    # fc1 + bias + ReLU  (MXU matmul, f32 accumulation; bias/ReLU on the VPU)
    h = jnp.dot(x_ref[...], w1_ref[...], preferred_element_type=jnp.float32)
    h = jnp.maximum(h + b1_ref[...], 0.0)          # (TILE_B, 128) + (1, 128) broadcast
    # dropout1: identity in eval mode (no masking / no scaling)
    # output_fc on padded 128-lane weights -> unmasked, lane-dense store
    out = jnp.dot(h, w2p_ref[...], preferred_element_type=jnp.float32)
    o_ref[...] = (out + b2p_ref[...]).astype(o_ref.dtype)


def audio_network_forward(x, w1_t, b1, w2_t, b2, *, tile_b=DEFAULT_TILE_B):
    """Forward pass of AudioNetwork.

    x    : (B, 192) f32
    w1_t : (192, 128) f32   -- fc1 weight, stored transposed (in, out)
    b1   : (1, 128)  f32
    w2_t : (128, 34) f32    -- output_fc weight, stored transposed (in, out)
    b2   : (1, 34)   f32
    returns (B, 34) f32
    """
    B = x.shape[0]

    # Zero-pad the output layer to 128 lanes (lane-dense stores, full MXU width).
    w2_pad = jnp.zeros((HID_DIM, OUT_PAD), jnp.float32).at[:, :OUT_DIM].set(w2_t)
    b2_pad = jnp.zeros((1, OUT_PAD), jnp.float32).at[:, :OUT_DIM].set(b2)

    # Pick a batch tile: multiple of 8 (f32 sublane), no larger than needed.
    tb = min(tile_b, _round_up(B, 8))
    b_padded = _round_up(B, tb)
    if b_padded != B:
        x = jnp.pad(x, ((0, b_padded - B), (0, 0)))
    grid = (b_padded // tb,)

    out_padded = pl.pallas_call(
        _audio_net_kernel,
        out_shape=jax.ShapeDtypeStruct((b_padded, OUT_PAD), jnp.float32),
        grid=grid,
        in_specs=[
            pl.BlockSpec((tb, IN_DIM), lambda i: (i, 0)),        # x: tiled over batch
            pl.BlockSpec((IN_DIM, HID_DIM), lambda i: (0, 0)),   # w1: VMEM-resident
            pl.BlockSpec((1, HID_DIM), lambda i: (0, 0)),        # b1: VMEM-resident
            pl.BlockSpec((HID_DIM, OUT_PAD), lambda i: (0, 0)),  # w2 (padded): resident
            pl.BlockSpec((1, OUT_PAD), lambda i: (0, 0)),        # b2 (padded): resident
        ],
        out_specs=pl.BlockSpec((tb, OUT_PAD), lambda i: (i, 0)),
        compiler_params=pltpu.CompilerParams(
            dimension_semantics=("parallel",),  # shard batch tiles across TCs (v7x)
        ),
    )(x, w1_t, b1, w2_pad, b2_pad)

    return out_padded[:B, :OUT_DIM]


def init_params(key):
    """Deterministic init mimicking nn.Linear default: U(-1/sqrt(fan_in), 1/sqrt(fan_in))."""
    k1, k2, k3, k4 = jax.random.split(key, 4)
    bound1 = 1.0 / (IN_DIM ** 0.5)
    bound2 = 1.0 / (HID_DIM ** 0.5)
    # PyTorch stores W as (out, in); we keep the transposed (in, out) layout for the kernel.
    w1_t = jax.random.uniform(k1, (IN_DIM, HID_DIM), jnp.float32, -bound1, bound1)
    b1 = jax.random.uniform(k2, (1, HID_DIM), jnp.float32, -bound1, bound1)
    w2_t = jax.random.uniform(k3, (HID_DIM, OUT_DIM), jnp.float32, -bound2, bound2)
    b2 = jax.random.uniform(k4, (1, OUT_DIM), jnp.float32, -bound2, bound2)
    return w1_t, b1, w2_t, b2


def _reference(x, w1_t, b1, w2_t, b2):
    h = jnp.maximum(x @ w1_t + b1, 0.0)
    return h @ w2_t + b2


if __name__ == "__main__":
    key = jax.random.PRNGKey(0)
    kx, kx2, kp = jax.random.split(key, 3)
    w1_t, b1, w2_t, b2 = init_params(kp)

    # Small-batch case (single grid step, tile clamped to 8 rows).
    B = 8
    x = jax.random.normal(kx, (B, IN_DIM), jnp.float32)
    out = jax.block_until_ready(audio_network_forward(x, w1_t, b1, w2_t, b2))
    ref = _reference(x, w1_t, b1, w2_t, b2)
    assert out.shape == (B, OUT_DIM), out.shape
    assert jnp.allclose(out, ref, atol=1e-5, rtol=1e-5), float(jnp.max(jnp.abs(out - ref)))

    # Multi-tile case: B not a multiple of the tile -> exercises the batch grid
    # (grid=(4,)) and the row-padding / output-slicing path.
    B2, tb2 = 200, 64
    x2 = jax.random.normal(kx2, (B2, IN_DIM), jnp.float32)
    out2 = jax.block_until_ready(audio_network_forward(x2, w1_t, b1, w2_t, b2, tile_b=tb2))
    ref2 = _reference(x2, w1_t, b1, w2_t, b2)
    assert out2.shape == (B2, OUT_DIM), out2.shape
    assert jnp.allclose(out2, ref2, atol=1e-5, rtol=1e-5), float(jnp.max(jnp.abs(out2 - ref2)))

    print("KERNEL_OK")
</pallas_src>

<mosaic_0001>
module attributes {stable_mosaic.version = 11 : i64} {
  func.func @_audio_net_kernel(%arg0: i32, %arg1: memref<8x192xf32, #tpu.memory_space<vmem>>, %arg2: memref<192x128xf32, #tpu.memory_space<vmem>>, %arg3: memref<1x128xf32, #tpu.memory_space<vmem>>, %arg4: memref<128x128xf32, #tpu.memory_space<vmem>>, %arg5: memref<1x128xf32, #tpu.memory_space<vmem>>, %arg6: memref<8x128xf32, #tpu.memory_space<vmem>>) attributes {dimension_semantics = [#tpu.dimension_semantics<parallel>], iteration_bounds = array<i64: 1>, scalar_prefetch = 0 : i64, scratch_operands = 0 : i64, tpu.core_type = #tpu.core_type<tc>, window_params = [{transform_indices = @transform_0, window_bounds = array<i64: 8, 192>}, {pipeline_mode = #tpu.pipeline_mode<synchronous>, transform_indices = @transform_1, window_bounds = array<i64: 192, 128>}, {pipeline_mode = #tpu.pipeline_mode<synchronous>, transform_indices = @transform_2, window_bounds = array<i64: 1, 128>}, {pipeline_mode = #tpu.pipeline_mode<synchronous>, transform_indices = @transform_3, window_bounds = array<i64: 128, 128>}, {pipeline_mode = #tpu.pipeline_mode<synchronous>, transform_indices = @transform_4, window_bounds = array<i64: 1, 128>}, {transform_indices = @transform_5, window_bounds = array<i64: 8, 128>}]} {
    %c0 = arith.constant 0 : index
    %c0_0 = arith.constant 0 : index
    %0 = vector.load %arg1[%c0, %c0_0] : memref<8x192xf32, #tpu.memory_space<vmem>>, vector<8x192xf32>
    %c0_1 = arith.constant 0 : index
    %c0_2 = arith.constant 0 : index
    %1 = vector.load %arg2[%c0_1, %c0_2] : memref<192x128xf32, #tpu.memory_space<vmem>>, vector<192x128xf32>
    %cst = arith.constant dense<0.000000e+00> : vector<8x128xf32>
    %2 = tpu.matmul %0, %1, %cst {dimension_numbers = #tpu.dot_dimension_numbers<[1], [0], [0], [1], [0, 0, 1, 1], [], []>} : vector<8x192xf32>, vector<192x128xf32>, vector<8x128xf32> -> vector<8x128xf32>
    %c0_3 = arith.constant 0 : index
    %c0_4 = arith.constant 0 : index
    %3 = vector.load %arg3[%c0_3, %c0_4] : memref<1x128xf32, #tpu.memory_space<vmem>>, vector<1x128xf32>
    %4 = vector.broadcast %3 : vector<1x128xf32> to vector<8x128xf32>
    %5 = arith.addf %2, %4 : vector<8x128xf32>
    %cst_5 = arith.constant 0.000000e+00 : f32
    %6 = vector.broadcast %cst_5 : f32 to vector<8x128xf32>
    %7 = arith.maximumf %5, %6 : vector<8x128xf32>
    %c0_6 = arith.constant 0 : index
    %c0_7 = arith.constant 0 : index
    %8 = vector.load %arg4[%c0_6, %c0_7] : memref<128x128xf32, #tpu.memory_space<vmem>>, vector<128x128xf32>
    %cst_8 = arith.constant dense<0.000000e+00> : vector<8x128xf32>
    %9 = tpu.matmul %7, %8, %cst_8 {dimension_numbers = #tpu.dot_dimension_numbers<[1], [0], [0], [1], [0, 0, 1, 1], [], []>} : vector<8x128xf32>, vector<128x128xf32>, vector<8x128xf32> -> vector<8x128xf32>
    %c0_9 = arith.constant 0 : index
    %c0_10 = arith.constant 0 : index
    %10 = vector.load %arg5[%c0_9, %c0_10] : memref<1x128xf32, #tpu.memory_space<vmem>>, vector<1x128xf32>
    %11 = vector.broadcast %10 : vector<1x128xf32> to vector<8x128xf32>
    %12 = arith.addf %9, %11 : vector<8x128xf32>
    %c0_11 = arith.constant 0 : index
    %c0_12 = arith.constant 0 : index
    %13 = vector.load %arg6[%c0_11, %c0_12] : memref<8x128xf32, #tpu.memory_space<vmem>>, vector<8x128xf32>
    tpu.vector_store %arg6[%c0_11, %c0_12], %12 {strides = array<i32>} : memref<8x128xf32, #tpu.memory_space<vmem>>, vector<8x128xf32>,
    return
  }
  func.func @transform_0(%arg0: i32) -> (i32, i32) {
    %c0_i32 = arith.constant 0 : i32
    %c0_i32_0 = arith.constant 0 : i32
    return %arg0, %c0_i32 : i32, i32
  }
  func.func @transform_1(%arg0: i32) -> (i32, i32) {
    %c0_i32 = arith.constant 0 : i32
    %c0_i32_0 = arith.constant 0 : i32
    %c0_i32_1 = arith.constant 0 : i32
    return %c0_i32, %c0_i32_0 : i32, i32
  }
  func.func @transform_2(%arg0: i32) -> (i32, i32) {
    %c0_i32 = arith.constant 0 : i32
    %c0_i32_0 = arith.constant 0 : i32
    %c0_i32_1 = arith.constant 0 : i32
    return %c0_i32, %c0_i32_0 : i32, i32
  }
  func.func @transform_3(%arg0: i32) -> (i32, i32) {
    %c0_i32 = arith.constant 0 : i32
    %c0_i32_0 = arith.constant 0 : i32
    %c0_i32_1 = arith.constant 0 : i32
    return %c0_i32, %c0_i32_0 : i32, i32
  }
  func.func @transform_4(%arg0: i32) -> (i32, i32) {
    %c0_i32 = arith.constant 0 : i32
    %c0_i32_0 = arith.constant 0 : i32
    %c0_i32_1 = arith.constant 0 : i32
    return %c0_i32, %c0_i32_0 : i32, i32
  }
  func.func @transform_5(%arg0: i32) -> (i32, i32) {
    %c0_i32 = arith.constant 0 : i32
    %c0_i32_0 = arith.constant 0 : i32
    return %arg0, %c0_i32 : i32, i32
  }
}

</mosaic_0001>

<llo_original>
// kernel: tpu_custom_call.1
$region0: #{tpu_custom_call.1}
  #allocation0 [shape = 'u32[]', space=smem, size = 0x4, offset = 0x4, fixed_abs, tag = 'smem constant byte address 0x4 - core index']
  #allocation1 [shape = 'u32[144,128]{1,0:T(1,128)}', space=vmem, size = 0x12000, scoped, tag = 'internal scratch']
  %s0 = inlined_call_operand.hbm [shape: f32[8,192], index: 0, kind: input, shape index: {}]
  %s1 = inlined_call_operand.hbm [shape: f32[192,128], index: 1, kind: input, shape index: {}]
  %s2 = inlined_call_operand.vmem [shape: f32[1,128], index: 2, kind: input, shape index: {}]
  %s3 = inlined_call_operand.hbm [shape: f32[128,128], index: 3, kind: input, shape index: {}]
  %s4 = inlined_call_operand.vmem [shape: f32[1,128], index: 4, kind: input, shape index: {}]
  %s5 = inlined_call_operand.hbm [shape: f32[8,128], index: 5, kind: output, shape index: {}]
  %s6 = sld [smem:[#allocation0]]
  $region42: #{tpu_custom_call.1} parent=0
    _
  %s8 = ssub.s32 1, %s6
  %s9 = scalar_select 0, %s8, %s6
  $region1: #{tpu_custom_call.1} parent=0
    #allocation2 [shape = 'u8[8192]{0}', space=vmem, size = 0x2000, scoped, tag = 'input window, operand 0, single buffered']
    #allocation3 [shape = 's32[1]{0}', space=sflag, size = 0x4, scoped, tag = 'scoped memory for tpu_custom_call.1']
    #allocation4 [shape = 's32[1]{0}', space=sflag, size = 0x4, scoped, tag = 'scoped memory for tpu_custom_call.1']
    #allocation5 [shape = 'u8[98304]{0}', space=vmem, size = 0x18000, scoped, tag = 'input window, operand 1, single buffered']
    #allocation6 [shape = 's32[1]{0}', space=sflag, size = 0x4, scoped, tag = 'scoped memory for tpu_custom_call.1']
    #allocation7 [shape = 'u8[65536]{0}', space=vmem, size = 0x10000, scoped, tag = 'input window, operand 3, single buffered']
    #allocation8 [shape = 'u8[4096]{0}', space=vmem, size = 0x1000, scoped, tag = 'output window, operand 0, single buffered']
    %10 = vsyncpa [#allocation3], 0
    %11 = vsyncpa [#allocation6], 0
    %12 = vsyncpa [#allocation4], 0
    // Predicated region
    $region2: #{tpu_custom_call.1} parent=1 // pred_check
      _
    $region3: #{tpu_custom_call.1} parent=1 // pred_check_branch
      %14 = sbr.rel (0) target = $region5
    $region4: #{tpu_custom_call.1} parent=1 // pred_region
      %s16 = ssub.s32 256, 256
      %17 = vsyncadd [#allocation3], %s16
      %s19 = sshll.u32 [#allocation2], 4
      %s20 = int_to_ptr.vmem [resolvable:$true] %s19
      %22 = dma.hbm_to_vmem [thread:$0]  %s0, 256, %s20, [#allocation3]
    $region5: #{tpu_custom_call.1} parent=1 // pred_fallthru
      _
    // Predicated region
    $region6: #{tpu_custom_call.1} parent=1 // pred_check
      _
    $region7: #{tpu_custom_call.1} parent=1 // pred_check_branch
      %24 = sbr.rel (0) target = $region9
    $region8: #{tpu_custom_call.1} parent=1 // pred_region
      %s26 = ssub.s32 3072, 3072
      %27 = vsyncadd [#allocation6], %s26
      %s28 = sshll.u32 [#allocation5], 4
      %s29 = int_to_ptr.vmem [resolvable:$true] %s28
      %34 = dma.hbm_to_vmem [thread:$0]  %s1, 3072, %s29, [#allocation6], 128, 128, 8
    $region9: #{tpu_custom_call.1} parent=1 // pred_fallthru
      _
    // Predicated region
    $region10: #{tpu_custom_call.1} parent=1 // pred_check
      _
    $region11: #{tpu_custom_call.1} parent=1 // pred_check_branch
      %36 = sbr.rel (0) target = $region13
    $region12: #{tpu_custom_call.1} parent=1 // pred_region
      _
    $region13: #{tpu_custom_call.1} parent=1 // pred_fallthru
      _
    // Predicated region
    $region14: #{tpu_custom_call.1} parent=1 // pred_check
      _
    $region15: #{tpu_custom_call.1} parent=1 // pred_check_branch
      %38 = sbr.rel (0) target = $region17
    $region16: #{tpu_custom_call.1} parent=1 // pred_region
      %s40 = ssub.s32 2048, 2048
      %41 = vsyncadd [#allocation6], %s40
      %s42 = sshll.u32 [#allocation7], 4
      %s43 = int_to_ptr.vmem [resolvable:$true] %s42
      %48 = dma.hbm_to_vmem [thread:$0]  %s3, 2048, %s43, [#allocation6], 128, 128, 8
    $region17: #{tpu_custom_call.1} parent=1 // pred_fallthru
      _
    // Predicated region
    $region18: #{tpu_custom_call.1} parent=1 // pred_check
      _
    $region19: #{tpu_custom_call.1} parent=1 // pred_check_branch
      %50 = sbr.rel (0) target = $region21
    $region20: #{tpu_custom_call.1} parent=1 // pred_region
      _
    $region21: #{tpu_custom_call.1} parent=1 // pred_fallthru
      _
    // Predicated region
    $region22: #{tpu_custom_call.1} parent=1 // pred_check
      _
    $region23: #{tpu_custom_call.1} parent=1 // pred_check_branch
      %52 = sbr.rel (0) target = $region25
    $region24: #{tpu_custom_call.1} parent=1 // pred_region
      %53 = dma.done [#allocation3], 256
    $region25: #{tpu_custom_call.1} parent=1 // pred_fallthru
      _
    // Predicated region
    $region26: #{tpu_custom_call.1} parent=1 // pred_check
      _
    $region27: #{tpu_custom_call.1} parent=1 // pred_check_branch
      %55 = sbr.rel (0) target = $region29
    $region28: #{tpu_custom_call.1} parent=1 // pred_region
      %56 = dma.done [#allocation6], 3072
    $region29: #{tpu_custom_call.1} parent=1 // pred_fallthru
      _
    // Predicated region
    $region30: #{tpu_custom_call.1} parent=1 // pred_check
      _
    $region31: #{tpu_custom_call.1} parent=1 // pred_check_branch
      %58 = sbr.rel (0) target = $region33
    $region32: #{tpu_custom_call.1} parent=1 // pred_region
      %59 = dma.done [#allocation6], 2048
    $region33: #{tpu_custom_call.1} parent=1 // pred_fallthru
      _
    %v60 = vld [vmem:[#allocation2] sm:$0xff]
    %v61 = vld [vmem:[#allocation2 + $0x8] sm:$0xff]
    %v62 = vld [vmem:[#allocation5] sm:$0xff]
    %v63 = vld [vmem:[#allocation5 + $0x8] sm:$0xff]
    %v64 = vld [vmem:[#allocation5 + $0x10] sm:$0xff]
    %v65 = vld [vmem:[#allocation5 + $0x18] sm:$0xff]
    %v66 = vld [vmem:[#allocation5 + $0x20] sm:$0xff]
    %v67 = vld [vmem:[#allocation5 + $0x28] sm:$0xff]
    %v68 = vld [vmem:[#allocation5 + $0x30] sm:$0xff]
    %v69 = vld [vmem:[#allocation5 + $0x38] sm:$0xff]
    %v70 = vld [vmem:[#allocation5 + $0x40] sm:$0xff]
    %v71 = vld [vmem:[#allocation5 + $0x48] sm:$0xff]
    %v72 = vld [vmem:[#allocation5 + $0x50] sm:$0xff]
    %v73 = vld [vmem:[#allocation5 + $0x58] sm:$0xff]
    %v74 = vld [vmem:[#allocation5 + $0x60] sm:$0xff]
    %v75 = vld [vmem:[#allocation5 + $0x68] sm:$0xff]
    %v76 = vld [vmem:[#allocation5 + $0x70] sm:$0xff]
    %v77 = vld [vmem:[#allocation5 + $0x78] sm:$0xff]
    %v78 = vld [vmem:[#allocation5 + $0x80] sm:$0xff]
    %v79 = vld [vmem:[#allocation5 + $0x88] sm:$0xff]
    %v80 = vld [vmem:[#allocation5 + $0x90] sm:$0xff]
    %v81 = vld [vmem:[#allocation5 + $0x98] sm:$0xff]
    %v82 = vld [vmem:[#allocation5 + $0xa0] sm:$0xff]
    %v83 = vld [vmem:[#allocation5 + $0xa8] sm:$0xff]
    %v84 = vld [vmem:[#allocation5 + $0xb0] sm:$0xff]
    %v85 = vld [vmem:[#allocation5 + $0xb8] sm:$0xff]
    %v86 = vld [vmem:[%s2] sm:$0x1]
    %v88 = vlaneseq
    %v89 = vshrl.u32 %v88, 7
    %v90 = vsub.s32 0, %v89
    %v91 = vrot.slane %v86, %v90
    %vm93 = vcmask 523264
    %v95 = vsel %vm93, %v61, 0
    %97 = vmatprep.subr.mxu0 0.0
    %98 = vmatpush1.msra.mxu0 %v62
    %99 = vmatprep.subr.mxu0 0.0
    %100 = vmatpush1.msra.mxu0 %v63
    %101 = vmatprep.subr.mxu0 0.0
    %102 = vmatpush1.msra.mxu0 %v64
    %103 = vmatprep.subr.mxu0 0.0
    %104 = vmatpush1.msra.mxu0 %v65
    %105 = vmatprep.subr.mxu0 0.0
    %106 = vmatpush1.msra.mxu0 %v66
    %107 = vmatprep.subr.mxu0 0.0
    %108 = vmatpush1.msra.mxu0 %v67
    %109 = vmatprep.subr.mxu0 0.0
    %110 = vmatpush1.msra.mxu0 %v68
    %111 = vmatprep.subr.mxu0 0.0
    %112 = vmatpush1.msra.mxu0 %v69
    %113 = vmatprep.subr.mxu0 0.0
    %114 = vmatpush1.msra.mxu0 %v70
    %115 = vmatprep.subr.mxu0 0.0
    %116 = vmatpush1.msra.mxu0 %v71
    %117 = vmatprep.subr.mxu0 0.0
    %118 = vmatpush1.msra.mxu0 %v72
    %119 = vmatprep.subr.mxu0 0.0
    %120 = vmatpush1.msra.mxu0 %v73
    %121 = vmatprep.subr.mxu0 0.0
    %122 = vmatpush1.msra.mxu0 %v74
    %123 = vmatprep.subr.mxu0 0.0
    %124 = vmatpush1.msra.mxu0 %v75
    %125 = vmatprep.subr.mxu0 0.0
    %126 = vmatpush1.msra.mxu0 %v76
    %127 = vmatprep.subr.mxu0 0.0
    %128 = vmatpush1.msra.mxu0 %v77
    %129 = vmatprep.subr.mxu0 0.0
    %130 = vmatpush1.msra.mxu0 %v78
    %131 = vmatprep.subr.mxu0 0.0
    %132 = vmatpush1.msra.mxu0 %v79
    %133 = vmatprep.subr.mxu0 0.0
    %134 = vmatpush1.msra.mxu0 %v80
    %135 = vmatprep.subr.mxu0 0.0
    %136 = vmatpush1.msra.mxu0 %v81
    %137 = vmatprep.subr.mxu0 0.0
    %138 = vmatpush1.msra.mxu0 %v82
    %139 = vmatprep.subr.mxu0 0.0
    %140 = vmatpush1.msra.mxu0 %v83
    %141 = vmatprep.subr.mxu0 0.0
    %142 = vmatpush1.msra.mxu0 %v84
    %143 = vmatprep.subr.mxu0 0.0
    %144 = vmatpush1.msra.mxu0 %v85
    %145 = vmatprep.subr.mxu0 0.0
    %146 = vmatpush1.msra.mxu0 0.0
    %147 = vmatprep.subr.mxu0 0.0
    %148 = vmatpush1.msra.mxu0 0.0
    %149 = vmatprep.subr.mxu0 0.0
    %150 = vmatpush1.msra.mxu0 0.0
    %151 = vmatprep.subr.mxu0 0.0
    %152 = vmatpush1.msra.mxu0 0.0
    %153 = vmatprep.subr.mxu0 0.0
    %154 = vmatpush1.msra.mxu0 0.0
    %155 = vmatprep.subr.mxu0 0.0
    %156 = vmatpush1.msra.mxu0 0.0
    %157 = vmatprep.subr.mxu0 0.0
    %158 = vmatpush1.msra.mxu0 0.0
    %159 = vmatprep.subr.mxu0 0.0
    %160 = vmatpush1.msra.mxu0 0.0
    %161 = vmatprep.mubr.f32.mxu0 %v95
    %162 = vmatmul.mubr.f32.gmra.mrb[0].mxu0 %v60
    %v163 = vpop.f32.mrb[0].mxu0
    %v164 = vadd.f32 %v91, %v163
    %v165 = vpop.f32.mrb[0].mxu0
    %166 = vdwg.mxu0
    %v167 = vmax.f32 %v164, 0.0
    %v168 = vld [vmem:[#allocation7] sm:$0xff]
    %v169 = vld [vmem:[#allocation7 + $0x8] sm:$0xff]
    %v170 = vld [vmem:[#allocation7 + $0x10] sm:$0xff]
    %v171 = vld [vmem:[#allocation7 + $0x18] sm:$0xff]
    %v172 = vld [vmem:[#allocation7 + $0x20] sm:$0xff]
    %v173 = vld [vmem:[#allocation7 + $0x28] sm:$0xff]
    %v174 = vld [vmem:[#allocation7 + $0x30] sm:$0xff]
    %v175 = vld [vmem:[#allocation7 + $0x38] sm:$0xff]
    %v176 = vld [vmem:[#allocation7 + $0x40] sm:$0xff]
    %v177 = vld [vmem:[#allocation7 + $0x48] sm:$0xff]
    %v178 = vld [vmem:[#allocation7 + $0x50] sm:$0xff]
    %v179 = vld [vmem:[#allocation7 + $0x58] sm:$0xff]
    %v180 = vld [vmem:[#allocation7 + $0x60] sm:$0xff]
    %v181 = vld [vmem:[#allocation7 + $0x68] sm:$0xff]
    %v182 = vld [vmem:[#allocation7 + $0x70] sm:$0xff]
    %v183 = vld [vmem:[#allocation7 + $0x78] sm:$0xff]
    %v184 = vld [vmem:[%s4] sm:$0x1]
    %v186 = vlaneseq
    %v187 = vshrl.u32 %v186, 7
    %v188 = vsub.s32 0, %v187
    %v189 = vrot.slane %v184, %v188
    %191 = vmatprep.subr.mxu0 0.0
    %192 = vmatpush1.msra.mxu0 %v168
    %193 = vmatprep.subr.mxu0 0.0
    %194 = vmatpush1.msra.mxu0 %v169
    %195 = vmatprep.subr.mxu0 0.0
    %196 = vmatpush1.msra.mxu0 %v170
    %197 = vmatprep.subr.mxu0 0.0
    %198 = vmatpush1.msra.mxu0 %v171
    %199 = vmatprep.subr.mxu0 0.0
    %200 = vmatpush1.msra.mxu0 %v172
    %201 = vmatprep.subr.mxu0 0.0
    %202 = vmatpush1.msra.mxu0 %v173
    %203 = vmatprep.subr.mxu0 0.0
    %204 = vmatpush1.msra.mxu0 %v174
    %205 = vmatprep.subr.mxu0 0.0
    %206 = vmatpush1.msra.mxu0 %v175
    %207 = vmatprep.subr.mxu0 0.0
    %208 = vmatpush1.msra.mxu0 %v176
    %209 = vmatprep.subr.mxu0 0.0
    %210 = vmatpush1.msra.mxu0 %v177
    %211 = vmatprep.subr.mxu0 0.0
    %212 = vmatpush1.msra.mxu0 %v178
    %213 = vmatprep.subr.mxu0 0.0
    %214 = vmatpush1.msra.mxu0 %v179
    %215 = vmatprep.subr.mxu0 0.0
    %216 = vmatpush1.msra.mxu0 %v180
    %217 = vmatprep.subr.mxu0 0.0
    %218 = vmatpush1.msra.mxu0 %v181
    %219 = vmatprep.subr.mxu0 0.0
    %220 = vmatpush1.msra.mxu0 %v182
    %221 = vmatprep.subr.mxu0 0.0
    %222 = vmatpush1.msra.mxu0 %v183
    %223 = vmatprep.subr.mxu0 0.0
    %224 = vmatpush1.msra.mxu0 0.0
    %225 = vmatprep.subr.mxu0 0.0
    %226 = vmatpush1.msra.mxu0 0.0
    %227 = vmatprep.subr.mxu0 0.0
    %228 = vmatpush1.msra.mxu0 0.0
    %229 = vmatprep.subr.mxu0 0.0
    %230 = vmatpush1.msra.mxu0 0.0
    %231 = vmatprep.subr.mxu0 0.0
    %232 = vmatpush1.msra.mxu0 0.0
    %233 = vmatprep.subr.mxu0 0.0
    %234 = vmatpush1.msra.mxu0 0.0
    %235 = vmatprep.subr.mxu0 0.0
    %236 = vmatpush1.msra.mxu0 0.0
    %237 = vmatprep.subr.mxu0 0.0
    %238 = vmatpush1.msra.mxu0 0.0
    %239 = vmatprep.subr.mxu0 0.0
    %240 = vmatpush1.msra.mxu0 0.0
    %241 = vmatprep.subr.mxu0 0.0
    %242 = vmatpush1.msra.mxu0 0.0
    %243 = vmatprep.subr.mxu0 0.0
    %244 = vmatpush1.msra.mxu0 0.0
    %245 = vmatprep.subr.mxu0 0.0
    %246 = vmatpush1.msra.mxu0 0.0
    %247 = vmatprep.subr.mxu0 0.0
    %248 = vmatpush1.msra.mxu0 0.0
    %249 = vmatprep.subr.mxu0 0.0
    %250 = vmatpush1.msra.mxu0 0.0
    %251 = vmatprep.subr.mxu0 0.0
    %252 = vmatpush1.msra.mxu0 0.0
    %253 = vmatprep.subr.mxu0 0.0
    %254 = vmatpush1.msra.mxu0 0.0
    %255 = vmatprep.mubr.f32.mxu0 0.0
    %256 = vmatmul.mubr.f32.gmra.mrb[0].mxu0 %v167
    %v257 = vpop.f32.mrb[0].mxu0
    %v258 = vadd.f32 %v189, %v257
    %v259 = vpop.f32.mrb[0].mxu0
    %260 = vdwg.mxu0
    %261 = vst [vmem:[#allocation8] sm:$0xff] %v258
    // Predicated region
    $region34: #{tpu_custom_call.1} parent=1 // pred_check
      _
    $region35: #{tpu_custom_call.1} parent=1 // pred_check_branch
      %263 = sbr.rel (0) target = $region37
    $region36: #{tpu_custom_call.1} parent=1 // pred_region
      %s265 = ssub.s32 128, 128
      %266 = vsyncadd [#allocation4], %s265
      %s268 = sshll.u32 [#allocation8], 4
      %s269 = int_to_ptr.vmem [resolvable:$true] %s268
      %271 = dma.vmem_to_hbm [thread:$0]  %s269, 128, %s5, [#allocation4]
    $region37: #{tpu_custom_call.1} parent=1 // pred_fallthru
      _
    // Predicated region
    $region38: #{tpu_custom_call.1} parent=1 // pred_check
      _
    $region39: #{tpu_custom_call.1} parent=1 // pred_check_branch
      %273 = sbr.rel (0) target = $region41
    $region40: #{tpu_custom_call.1} parent=1 // pred_region
      %274 = dma.done [#allocation4], 128
    $region41: #{tpu_custom_call.1} parent=1 // pred_fallthru
      _
    %275 = vsyncpa [#allocation3], 1
    %276 = vsyncpa [#allocation6], 1
    %277 = vsyncpa [#allocation4], 1

</llo_original>
